<compile_context>
chip_gen: v7x
topology: tpu7x:2x2x1
jax: 0.10.0
libtpu: 0.0.40
codegen_flags: <defaults>
</compile_context>

<pallas_src>
import functools

import jax
import jax.numpy as jnp
from jax.experimental import pallas as pl
from jax.experimental.pallas import tpu as pltpu

HIDDEN = 500   # logical hidden size, matches torch.nn.Linear(in_features, 500)
LANE = 128


def _round_up(x, m):
    return (x + m - 1) // m * m


def mlp_kernel(x_ref, w1_ref, b1_ref, w2_ref, b2_ref, o_ref):
    # Layer 1: MXU matmul with f32 accumulation; bias + ReLU in f32 on the VPU.
    h = jnp.dot(x_ref[...], w1_ref[...], preferred_element_type=jnp.float32)
    h = jnp.maximum(h + b1_ref[...], 0.0)
    # Layer 2: cast h once to the weight dtype (bf16 path on v6e/v7x), f32 acc.
    out = jnp.dot(h.astype(w2_ref.dtype), w2_ref[...],
                  preferred_element_type=jnp.float32)
    o_ref[...] = (out + b2_ref[...]).astype(o_ref.dtype)


@functools.partial(jax.jit, static_argnames=("block_n", "compute_dtype"))
def mlp_forward(x, w1, b1, w2, b2, *, block_n=128, compute_dtype=jnp.float32):
    n, in_features = x.shape
    hidden = w1.shape[1]
    out_features = w2.shape[1]

    # ---- wrapper-side padding for clean (8,128) tiling & lane-dense output ----
    n_pad = _round_up(max(n, 1), block_n)
    hid_pad = _round_up(hidden, LANE)        # 500 -> 512
    out_pad = _round_up(out_features, LANE)  # 10  -> 128

    cdt = jnp.dtype(compute_dtype)
    xp = jnp.zeros((n_pad, in_features), cdt).at[:n, :].set(x.astype(cdt))
    w1p = jnp.zeros((in_features, hid_pad), cdt).at[:, :hidden].set(w1.astype(cdt))
    b1p = jnp.zeros((1, hid_pad), jnp.float32).at[:, :hidden].set(
        b1.astype(jnp.float32).reshape(1, -1))
    w2p = jnp.zeros((hid_pad, out_pad), cdt).at[:hidden, :out_features].set(
        w2.astype(cdt))
    b2p = jnp.zeros((1, out_pad), jnp.float32).at[:, :out_features].set(
        b2.astype(jnp.float32).reshape(1, -1))

    grid = (n_pad // block_n,)

    flops = 2 * n_pad * in_features * hid_pad + 2 * n_pad * hid_pad * out_pad
    bytes_accessed = (
        xp.size * cdt.itemsize
        + w1p.size * cdt.itemsize + w2p.size * cdt.itemsize
        + b1p.size * 4 + b2p.size * 4
        + n_pad * out_pad * 4)

    out_padded = pl.pallas_call(
        mlp_kernel,
        out_shape=jax.ShapeDtypeStruct((n_pad, out_pad), jnp.float32),
        grid_spec=pltpu.PrefetchScalarGridSpec(
            num_scalar_prefetch=0,
            grid=grid,
            in_specs=[
                # batch tile of x
                pl.BlockSpec((block_n, in_features), lambda i: (i, 0)),
                # grid-invariant weights / biases (constant index_map -> resident)
                pl.BlockSpec((in_features, hid_pad), lambda i: (0, 0)),
                pl.BlockSpec((1, hid_pad), lambda i: (0, 0)),
                pl.BlockSpec((hid_pad, out_pad), lambda i: (0, 0)),
                pl.BlockSpec((1, out_pad), lambda i: (0, 0)),
            ],
            # lane-dense (multiple of 128) output tile -> unmasked vector stores
            out_specs=pl.BlockSpec((block_n, out_pad), lambda i: (i, 0)),
        ),
        compiler_params=pltpu.CompilerParams(
            dimension_semantics=("parallel",),
        ),
        cost_estimate=pl.CostEstimate(
            flops=flops, transcendentals=0, bytes_accessed=bytes_accessed),
    )(xp, w1p, b1p, w2p, b2p)

    # Slice padded rows / lanes back to the logical shape.
    return out_padded[:n, :out_features].astype(x.dtype)


def init_params(key, in_features, out_features, dtype=jnp.float32):
    """Deterministic init mimicking torch.nn.Linear (uniform +/- 1/sqrt(fan_in))."""
    k1, k2, k3, k4 = jax.random.split(key, 4)
    bound1 = 1.0 / jnp.sqrt(in_features)
    bound2 = 1.0 / jnp.sqrt(HIDDEN)
    w1 = jax.random.uniform(k1, (in_features, HIDDEN), dtype, -bound1, bound1)
    b1 = jax.random.uniform(k2, (1, HIDDEN), dtype, -bound1, bound1)
    w2 = jax.random.uniform(k3, (HIDDEN, out_features), dtype, -bound2, bound2)
    b2 = jax.random.uniform(k4, (1, out_features), dtype, -bound2, bound2)
    return w1, b1, w2, b2


if __name__ == "__main__":
    # Small but representative: ragged batch (exercises wrapper padding) and a
    # grid of 2 parallel steps at block_n=128.
    N, IN_FEATURES, OUT_FEATURES = 200, 32, 10

    key = jax.random.PRNGKey(0)
    kx, kp = jax.random.split(key)
    x = jax.random.normal(kx, (N, IN_FEATURES), jnp.float32)
    w1, b1, w2, b2 = init_params(kp, IN_FEATURES, OUT_FEATURES)

    # Pure-JAX reference of the forward semantics.
    ref = jnp.maximum(x @ w1 + b1, 0.0) @ w2 + b2

    # f32 path (default; exact match to reference).
    out = mlp_forward(x, w1, b1, w2, b2, block_n=128)
    out = jax.block_until_ready(out)
    assert out.shape == (N, OUT_FEATURES)
    assert jnp.allclose(out, ref, atol=1e-5, rtol=1e-5)

    # bf16-weight path (v6e/v7x MXU fast path) with f32 accumulation.
    out_bf16 = mlp_forward(x, w1, b1, w2, b2, block_n=128,
                           compute_dtype=jnp.bfloat16)
    out_bf16 = jax.block_until_ready(out_bf16)
    assert out_bf16.shape == (N, OUT_FEATURES)
    assert jnp.allclose(out_bf16, ref, atol=1e-1, rtol=1e-1)

    print("KERNEL_OK")
</pallas_src>

<mosaic_0001>
module attributes {stable_mosaic.version = 11 : i64} {
  func.func @mlp_kernel(%arg0: i32, %arg1: memref<128x32xf32, #tpu.memory_space<vmem>>, %arg2: memref<32x512xf32, #tpu.memory_space<vmem>>, %arg3: memref<1x512xf32, #tpu.memory_space<vmem>>, %arg4: memref<512x128xf32, #tpu.memory_space<vmem>>, %arg5: memref<1x128xf32, #tpu.memory_space<vmem>>, %arg6: memref<128x128xf32, #tpu.memory_space<vmem>>) attributes {dimension_semantics = [#tpu.dimension_semantics<parallel>], iteration_bounds = array<i64: 2>, scalar_prefetch = 0 : i64, scratch_operands = 0 : i64, tpu.core_type = #tpu.core_type<tc>, window_params = [{transform_indices = @transform_0, window_bounds = array<i64: 128, 32>}, {pipeline_mode = #tpu.pipeline_mode<synchronous>, transform_indices = @transform_1, window_bounds = array<i64: 32, 512>}, {pipeline_mode = #tpu.pipeline_mode<synchronous>, transform_indices = @transform_2, window_bounds = array<i64: 1, 512>}, {pipeline_mode = #tpu.pipeline_mode<synchronous>, transform_indices = @transform_3, window_bounds = array<i64: 512, 128>}, {pipeline_mode = #tpu.pipeline_mode<synchronous>, transform_indices = @transform_4, window_bounds = array<i64: 1, 128>}, {transform_indices = @transform_5, window_bounds = array<i64: 128, 128>}]} {
    %c0 = arith.constant 0 : index
    %c0_0 = arith.constant 0 : index
    %0 = vector.load %arg1[%c0, %c0_0] : memref<128x32xf32, #tpu.memory_space<vmem>>, vector<128x32xf32>
    %c0_1 = arith.constant 0 : index
    %c0_2 = arith.constant 0 : index
    %1 = vector.load %arg2[%c0_1, %c0_2] : memref<32x512xf32, #tpu.memory_space<vmem>>, vector<32x512xf32>
    %cst = arith.constant dense<0.000000e+00> : vector<128x512xf32>
    %2 = tpu.matmul %0, %1, %cst {dimension_numbers = #tpu.dot_dimension_numbers<[1], [0], [0], [1], [0, 0, 1, 1], [], []>} : vector<128x32xf32>, vector<32x512xf32>, vector<128x512xf32> -> vector<128x512xf32>
    %c0_3 = arith.constant 0 : index
    %c0_4 = arith.constant 0 : index
    %3 = vector.load %arg3[%c0_3, %c0_4] : memref<1x512xf32, #tpu.memory_space<vmem>>, vector<1x512xf32>
    %4 = vector.broadcast %3 : vector<1x512xf32> to vector<128x512xf32>
    %5 = arith.addf %2, %4 : vector<128x512xf32>
    %cst_5 = arith.constant 0.000000e+00 : f32
    %6 = vector.broadcast %cst_5 : f32 to vector<128x512xf32>
    %7 = arith.maximumf %5, %6 : vector<128x512xf32>
    %c0_6 = arith.constant 0 : index
    %c0_7 = arith.constant 0 : index
    %8 = vector.load %arg4[%c0_6, %c0_7] : memref<512x128xf32, #tpu.memory_space<vmem>>, vector<512x128xf32>
    %cst_8 = arith.constant dense<0.000000e+00> : vector<128x128xf32>
    %9 = tpu.matmul %7, %8, %cst_8 {dimension_numbers = #tpu.dot_dimension_numbers<[1], [0], [0], [1], [0, 0, 1, 1], [], []>} : vector<128x512xf32>, vector<512x128xf32>, vector<128x128xf32> -> vector<128x128xf32>
    %c0_9 = arith.constant 0 : index
    %c0_10 = arith.constant 0 : index
    %10 = vector.load %arg5[%c0_9, %c0_10] : memref<1x128xf32, #tpu.memory_space<vmem>>, vector<1x128xf32>
    %11 = vector.broadcast %10 : vector<1x128xf32> to vector<128x128xf32>
    %12 = arith.addf %9, %11 : vector<128x128xf32>
    %c0_11 = arith.constant 0 : index
    %c0_12 = arith.constant 0 : index
    %13 = vector.load %arg6[%c0_11, %c0_12] : memref<128x128xf32, #tpu.memory_space<vmem>>, vector<128x128xf32>
    tpu.vector_store %arg6[%c0_11, %c0_12], %12 {strides = array<i32>} : memref<128x128xf32, #tpu.memory_space<vmem>>, vector<128x128xf32>,
    return
  }
  func.func @transform_0(%arg0: i32) -> (i32, i32) {
    %c0_i32 = arith.constant 0 : i32
    %c0_i32_0 = arith.constant 0 : i32
    return %arg0, %c0_i32 : i32, i32
  }
  func.func @transform_1(%arg0: i32) -> (i32, i32) {
    %c0_i32 = arith.constant 0 : i32
    %c0_i32_0 = arith.constant 0 : i32
    %c0_i32_1 = arith.constant 0 : i32
    return %c0_i32, %c0_i32_0 : i32, i32
  }
  func.func @transform_2(%arg0: i32) -> (i32, i32) {
    %c0_i32 = arith.constant 0 : i32
    %c0_i32_0 = arith.constant 0 : i32
    %c0_i32_1 = arith.constant 0 : i32
    return %c0_i32, %c0_i32_0 : i32, i32
  }
  func.func @transform_3(%arg0: i32) -> (i32, i32) {
    %c0_i32 = arith.constant 0 : i32
    %c0_i32_0 = arith.constant 0 : i32
    %c0_i32_1 = arith.constant 0 : i32
    return %c0_i32, %c0_i32_0 : i32, i32
  }
  func.func @transform_4(%arg0: i32) -> (i32, i32) {
    %c0_i32 = arith.constant 0 : i32
    %c0_i32_0 = arith.constant 0 : i32
    %c0_i32_1 = arith.constant 0 : i32
    return %c0_i32, %c0_i32_0 : i32, i32
  }
  func.func @transform_5(%arg0: i32) -> (i32, i32) {
    %c0_i32 = arith.constant 0 : i32
    %c0_i32_0 = arith.constant 0 : i32
    return %arg0, %c0_i32 : i32, i32
  }
}

</mosaic_0001>

<llo_original>
// kernel: mlp_forward.1
$region0: #{mlp_forward.1}
  #allocation0 [shape = 'u32[]', space=smem, size = 0x4, offset = 0x4, fixed_abs, tag = 'smem constant byte address 0x4 - core index']
  #allocation1 [shape = 'u32[144,128]{1,0:T(1,128)}', space=vmem, size = 0x12000, scoped, tag = 'internal scratch']
  %s0 = inlined_call_operand.vmem [shape: f32[256,32], index: 0, kind: input, shape index: {}]
  %s1 = inlined_call_operand.vmem [shape: f32[32,512], index: 1, kind: input, shape index: {}]
  %s2 = inlined_call_operand.vmem [shape: f32[1,512], index: 2, kind: input, shape index: {}]
  %s3 = inlined_call_operand.vmem [shape: f32[512,128], index: 3, kind: input, shape index: {}]
  %s4 = inlined_call_operand.vmem [shape: f32[1,128], index: 4, kind: input, shape index: {}]
  %s5 = inlined_call_operand.vmem [shape: f32[256,128], index: 5, kind: output, shape index: {}]
  %s6 = sld [smem:[#allocation0]]
  $region53: #{mlp_forward.1} parent=0
    _
  %s8 = ssub.s32 1, %s6
  %s9 = scalar_select 0, %s8, %s6
  loop: start=0, step=1, limit=4
  $region2: #{mlp_forward.1} parent=0 // loop_pre_header
    _
  $region3: #{mlp_forward.1} parent=0 // loop_header
    %s11 = sphi 0, %s15
    %p12 = scmp.ge.s32.totalorder %s11, 4
    %s21 = sphi 0, %s23
    %s24 = sphi 0, %s21
    %s25 = sphi 0, %s24
    %s41 = sphi 0, %s25
    %s45 = sphi 0, %s45
    %s47 = sphi 0, %s45
    %s48 = sphi 0, %s47
    %s62 = sphi 0, %s48
    %s66 = sphi 0, %s66
    %s68 = sphi 0, %s66
    %s69 = sphi 0, %s68
    %s83 = sphi 0, %s69
    %s87 = sphi 0, %s87
    %s89 = sphi 0, %s87
    %s90 = sphi 0, %s89
    %s104 = sphi 0, %s90
    %s108 = sphi 0, %s108
    %s110 = sphi 0, %s108
    %s111 = sphi 0, %s110
    %s125 = sphi 0, %s111
    %s131 = sphi 0, %s133
    %s134 = sphi 0, %s131
    %s135 = sphi 0, %s134
    %s151 = sphi 0, %s135
  $region4: #{mlp_forward.1} parent=0 // loop_header_branch
    %14 = sbr.rel (%p12) target = $region8
  $region5: #{mlp_forward.1} parent=0 // loop_body
    %s16 = ssub.s32 %s11, 1
    %s17 = ssub.s32 %s11, 2
    %s18 = sadd.s32 %s11, 1
    %s19 = ssub.s32 %s11, %s18
    %p20 = scmp.eq.s32.totalorder %s19, 0
    %s22 = sadd.s32 %s21, 1
    %s23 = scalar_select %p20, %s21, %s22
    %p26 = pneg %p20
    %p27 = scmp.eq.s32.totalorder %s11, 1
    %p28 = por %p26, %p27
    %p29 = scmp.ne.s32.totalorder %s21, %s24
    %p30 = scmp.eq.s32.totalorder %s11, 0
    %p31 = por %p29, %p30
    %p32 = scmp.ne.s32.totalorder %s21, %s24
    %p33 = scmp.eq.s32.totalorder %s16, 1
    %p34 = por %p32, %p33
    %p35 = scmp.ne.s32.totalorder %s24, %s25
    %p36 = scmp.eq.s32.totalorder %s16, 0
    %p37 = por %p35, %p36
    %p38 = scmp.ne.s32.totalorder %s24, %s25
    %p39 = scmp.eq.s32.totalorder %s17, 1
    %p40 = por %p38, %p39
    %p42 = scmp.ne.s32.totalorder %s25, %s41
    %p43 = scmp.eq.s32.totalorder %s17, 0
    %p44 = por %p42, %p43
    %s46 = sadd.s32 %s45, 1
    %p49 = scmp.eq.s32.totalorder %s11, 1
    %p50 = scmp.ne.s32.totalorder %s45, %s47
    %p51 = scmp.eq.s32.totalorder %s11, 0
    %p52 = por %p50, %p51
    %p53 = scmp.ne.s32.totalorder %s45, %s47
    %p54 = scmp.eq.s32.totalorder %s16, 1
    %p55 = por %p53, %p54
    %p56 = scmp.ne.s32.totalorder %s47, %s48
    %p57 = scmp.eq.s32.totalorder %s16, 0
    %p58 = por %p56, %p57
    %p59 = scmp.ne.s32.totalorder %s47, %s48
    %p60 = scmp.eq.s32.totalorder %s17, 1
    %p61 = por %p59, %p60
    %p63 = scmp.ne.s32.totalorder %s48, %s62
    %p64 = scmp.eq.s32.totalorder %s17, 0
    %p65 = por %p63, %p64
    %s67 = sadd.s32 %s66, 1
    %p70 = scmp.eq.s32.totalorder %s11, 1
    %p71 = scmp.ne.s32.totalorder %s66, %s68
    %p72 = scmp.eq.s32.totalorder %s11, 0
    %p73 = por %p71, %p72
    %p74 = scmp.ne.s32.totalorder %s66, %s68
    %p75 = scmp.eq.s32.totalorder %s16, 1
    %p76 = por %p74, %p75
    %p77 = scmp.ne.s32.totalorder %s68, %s69
    %p78 = scmp.eq.s32.totalorder %s16, 0
    %p79 = por %p77, %p78
    %p80 = scmp.ne.s32.totalorder %s68, %s69
    %p81 = scmp.eq.s32.totalorder %s17, 1
    %p82 = por %p80, %p81
    %p84 = scmp.ne.s32.totalorder %s69, %s83
    %p85 = scmp.eq.s32.totalorder %s17, 0
    %p86 = por %p84, %p85
    %s88 = sadd.s32 %s87, 1
    %p91 = scmp.eq.s32.totalorder %s11, 1
    %p92 = scmp.ne.s32.totalorder %s87, %s89
    %p93 = scmp.eq.s32.totalorder %s11, 0
    %p94 = por %p92, %p93
    %p95 = scmp.ne.s32.totalorder %s87, %s89
    %p96 = scmp.eq.s32.totalorder %s16, 1
    %p97 = por %p95, %p96
    %p98 = scmp.ne.s32.totalorder %s89, %s90
    %p99 = scmp.eq.s32.totalorder %s16, 0
    %p100 = por %p98, %p99
    %p101 = scmp.ne.s32.totalorder %s89, %s90
    %p102 = scmp.eq.s32.totalorder %s17, 1
    %p103 = por %p101, %p102
    %p105 = scmp.ne.s32.totalorder %s90, %s104
    %p106 = scmp.eq.s32.totalorder %s17, 0
    %p107 = por %p105, %p106
    %s109 = sadd.s32 %s108, 1
    %p112 = scmp.eq.s32.totalorder %s11, 1
    %p113 = scmp.ne.s32.totalorder %s108, %s110
    %p114 = scmp.eq.s32.totalorder %s11, 0
    %p115 = por %p113, %p114
    %p116 = scmp.ne.s32.totalorder %s108, %s110
    %p117 = scmp.eq.s32.totalorder %s16, 1
    %p118 = por %p116, %p117
    %p119 = scmp.ne.s32.totalorder %s110, %s111
    %p120 = scmp.eq.s32.totalorder %s16, 0
    %p121 = por %p119, %p120
    %p122 = scmp.ne.s32.totalorder %s110, %s111
    %p123 = scmp.eq.s32.totalorder %s17, 1
    %p124 = por %p122, %p123
    %p126 = scmp.ne.s32.totalorder %s111, %s125
    %p127 = scmp.eq.s32.totalorder %s17, 0
    %p128 = por %p126, %p127
    %s129 = ssub.s32 %s11, %s18
    %p130 = scmp.eq.s32.totalorder %s129, 0
    %s132 = sadd.s32 %s131, 1
    %s133 = scalar_select %p130, %s131, %s132
    %p136 = pneg %p130
    %p137 = scmp.eq.s32.totalorder %s11, 1
    %p138 = por %p136, %p137
    %p139 = scmp.ne.s32.totalorder %s131, %s134
    %p140 = scmp.eq.s32.totalorder %s11, 0
    %p141 = por %p139, %p140
    %p142 = scmp.ne.s32.totalorder %s131, %s134
    %p143 = scmp.eq.s32.totalorder %s16, 1
    %p144 = por %p142, %p143
    %p145 = scmp.ne.s32.totalorder %s134, %s135
    %p146 = scmp.eq.s32.totalorder %s16, 0
    %p147 = por %p145, %p146
    %p148 = scmp.ne.s32.totalorder %s134, %s135
    %p149 = scmp.eq.s32.totalorder %s17, 1
    %p150 = por %p148, %p149
    %p152 = scmp.ne.s32.totalorder %s135, %s151
    %p153 = scmp.eq.s32.totalorder %s17, 0
    %p154 = por %p152, %p153
    %p155 = scmp.le.s32.totalorder 1, %s11
    %p156 = scmp.lt.s32.totalorder %s11, 3
    %p157 = pnand %p155, %p156
    %p158 = pneg %p157
    // Predicated region
    $region9: #{mlp_forward.1} parent=5 // pred_check
      _
    $region10: #{mlp_forward.1} parent=5 // pred_check_branch
      %160 = sbr.rel (%p157) target = $region12
    $region11: #{mlp_forward.1} parent=5 // pred_region
      %s161 = ssub.s32 %s11, 1
      // Predicated region
      $region13: #{mlp_forward.1} parent=11 // pred_check
        %p162 = pneg %p58
      $region14: #{mlp_forward.1} parent=11 // pred_check_branch
        %164 = sbr.rel (%p162) target = $region16
      $region15: #{mlp_forward.1} parent=11 // pred_region
        _
      $region16: #{mlp_forward.1} parent=11 // pred_fallthru
        _
      // Predicated region
      $region17: #{mlp_forward.1} parent=11 // pred_check
        %p165 = pneg %p79
      $region18: #{mlp_forward.1} parent=11 // pred_check_branch
        %167 = sbr.rel (%p165) target = $region20
      $region19: #{mlp_forward.1} parent=11 // pred_region
        _
      $region20: #{mlp_forward.1} parent=11 // pred_fallthru
        _
      // Predicated region
      $region21: #{mlp_forward.1} parent=11 // pred_check
        %p168 = pneg %p100
      $region22: #{mlp_forward.1} parent=11 // pred_check_branch
        %170 = sbr.rel (%p168) target = $region24
      $region23: #{mlp_forward.1} parent=11 // pred_region
        _
      $region24: #{mlp_forward.1} parent=11 // pred_fallthru
        _
      // Predicated region
      $region25: #{mlp_forward.1} parent=11 // pred_check
        %p171 = pneg %p121
      $region26: #{mlp_forward.1} parent=11 // pred_check_branch
        %173 = sbr.rel (%p171) target = $region28
      $region27: #{mlp_forward.1} parent=11 // pred_region
        _
      $region28: #{mlp_forward.1} parent=11 // pred_fallthru
        _
    $region12: #{mlp_forward.1} parent=5 // pred_fallthru
      _
    %p174 = scmp.lt.s32.totalorder %s11, 2
    // Predicated region
    $region29: #{mlp_forward.1} parent=5 // pred_check
      %p175 = pneg %p174
    $region30: #{mlp_forward.1} parent=5 // pred_check_branch
      %177 = sbr.rel (%p175) target = $region32
    $region31: #{mlp_forward.1} parent=5 // pred_region
      // Predicated region
      $region33: #{mlp_forward.1} parent=31 // pred_check
        %p178 = pneg %p31
      $region34: #{mlp_forward.1} parent=31 // pred_check_branch
        %180 = sbr.rel (%p178) target = $region36
      $region35: #{mlp_forward.1} parent=31 // pred_region
        %s181 = smul.u32 16, %s11
        %p182 = scmp.lt.s32.totalorder %s181, 31
        %s183 = scalar_select %p182, %s181, 31
        %s184 = smul.addr %s183, 8
        %s185 = scalar_lea.vmem %s0, %s184
        %s186 = smul.u32 16, %s11
      $region36: #{mlp_forward.1} parent=31 // pred_fallthru
        _
    $region32: #{mlp_forward.1} parent=5 // pred_fallthru
      _
    %p187 = scmp.le.s32.totalorder 1, %s11
    %p188 = scmp.lt.s32.totalorder %s11, 3
    %p189 = pnand %p187, %p188
    %p190 = pneg %p189
    // Predicated region
    $region37: #{mlp_forward.1} parent=5 // pred_check
      _
    $region38: #{mlp_forward.1} parent=5 // pred_check_branch
      %192 = sbr.rel (%p189) target = $region40
    $region39: #{mlp_forward.1} parent=5 // pred_region
      %s193 = ssub.s32 %s11, 1
      %s194 = smul.u32 16, %s16
      %p195 = scmp.lt.s32.totalorder %s194, 31
      %s196 = scalar_select %p195, %s194, 31
      %s197 = smul.addr %s196, 8
      %s198 = scalar_lea.vmem %s0, %s197
      %p199 = pneg %p37
      %p200 = pneg %p34
      %p201 = pneg %p58
      %p202 = pneg %p55
      %p203 = pneg %p79
      %p204 = pneg %p76
      %p205 = pneg %p100
      %p206 = pneg %p97
      %p207 = pneg %p121
      %p208 = pneg %p118
      %p209 = pneg %p147
      %p210 = pneg %p144
      %s211 = smul.u32 16, %s16
      %p212 = scmp.lt.s32.totalorder %s211, 31
      %s213 = scalar_select %p212, %s211, 31
      %s214 = smul.addr %s213, 8
      %s215 = scalar_lea.vmem %s5, %s214
      %s216 = smul.u32 16, %s16
      %p217 = scmp.lt.s32.totalorder %s216, 31
      %s218 = scalar_select %p217, %s216, 31
      %s219 = smul.addr %s218, 8
      %s220 = scalar_lea.vmem %s0, %s219
      %s221 = smul.u32 16, %s16
      %s222 = smul.u32 16, %s16
      %p223 = scmp.lt.s32.totalorder %s222, 31
      %s224 = scalar_select %p223, %s222, 31
      %s225 = smul.addr %s224, 8
      %s226 = scalar_lea.vmem %s5, %s225
      %s227 = smul.u32 16, %s16
      %v228 = vld [vmem:[%s220] sm:$0xff]
      %v229 = vld [vmem:[%s220 + $0x8] sm:$0xff]
      %v230 = vld [vmem:[%s220 + $0x10] sm:$0xff]
      %v231 = vld [vmem:[%s220 + $0x18] sm:$0xff]
      %v232 = vld [vmem:[%s220 + $0x20] sm:$0xff]
      %v233 = vld [vmem:[%s220 + $0x28] sm:$0xff]
      %v234 = vld [vmem:[%s220 + $0x30] sm:$0xff]
      %v235 = vld [vmem:[%s220 + $0x38] sm:$0xff]
      %v236 = vld [vmem:[%s220 + $0x40] sm:$0xff]
      %v237 = vld [vmem:[%s220 + $0x48] sm:$0xff]
      %v238 = vld [vmem:[%s220 + $0x50] sm:$0xff]
      %v239 = vld [vmem:[%s220 + $0x58] sm:$0xff]
      %v240 = vld [vmem:[%s220 + $0x60] sm:$0xff]
      %v241 = vld [vmem:[%s220 + $0x68] sm:$0xff]
      %v242 = vld [vmem:[%s220 + $0x70] sm:$0xff]
      %v243 = vld [vmem:[%s220 + $0x78] sm:$0xff]
      %v244 = vld [vmem:[%s1] sm:$0xff]
      %v245 = vld [vmem:[%s1 + $0x8] sm:$0xff]
      %v246 = vld [vmem:[%s1 + $0x10] sm:$0xff]
      %v247 = vld [vmem:[%s1 + $0x18] sm:$0xff]
      %v248 = vld [vmem:[%s1 + $0x20] sm:$0xff]
      %v249 = vld [vmem:[%s1 + $0x28] sm:$0xff]
      %v250 = vld [vmem:[%s1 + $0x30] sm:$0xff]
      %v251 = vld [vmem:[%s1 + $0x38] sm:$0xff]
      %v252 = vld [vmem:[%s1 + $0x40] sm:$0xff]
      %v253 = vld [vmem:[%s1 + $0x48] sm:$0xff]
      %v254 = vld [vmem:[%s1 + $0x50] sm:$0xff]
      %v255 = vld [vmem:[%s1 + $0x58] sm:$0xff]
      %v256 = vld [vmem:[%s1 + $0x60] sm:$0xff]
      %v257 = vld [vmem:[%s1 + $0x68] sm:$0xff]
      %v258 = vld [vmem:[%s1 + $0x70] sm:$0xff]
      %v259 = vld [vmem:[%s1 + $0x78] sm:$0xff]
      %v260 = vld [vmem:[%s2] sm:$0xf]
      %v262 = vlaneseq
      %v263 = vshrl.u32 %v262, 7
      %v264 = vsub.s32 0, %v263
      %v265 = vrot.slane %v260, %v264
      %v266 = vlaneseq
      %v267 = vshrl.u32 %v266, 7
      %v268 = vsub.s32 1, %v267
      %v269 = vrot.slane %v260, %v268
      %v270 = vlaneseq
      %v271 = vshrl.u32 %v270, 7
      %v272 = vsub.s32 2, %v271
      %v273 = vrot.slane %v260, %v272
      %v274 = vlaneseq
      %v275 = vshrl.u32 %v274, 7
      %v276 = vsub.s32 3, %v275
      %v277 = vrot.slane %v260, %v276
      %vm282 = vcmask 261120
      %v284 = vsel %vm282, %v228, 0
      %v287 = vsel %vm282, %v229, 0
      %v290 = vsel %vm282, %v230, 0
      %v293 = vsel %vm282, %v231, 0
      %v296 = vsel %vm282, %v232, 0
      %v299 = vsel %vm282, %v233, 0
      %v302 = vsel %vm282, %v234, 0
      %v305 = vsel %vm282, %v235, 0
      %v308 = vsel %vm282, %v236, 0
      %v311 = vsel %vm282, %v237, 0
      %v314 = vsel %vm282, %v238, 0
      %v317 = vsel %vm282, %v239, 0
      %v320 = vsel %vm282, %v240, 0
      %v323 = vsel %vm282, %v241, 0
      %v326 = vsel %vm282, %v242, 0
      %v329 = vsel %vm282, %v243, 0
      %331 = vmatprep.subr.mxu0 %v245
      %332 = vmatpush1.msra.mxu0 %v244
      %333 = vmatprep.subr.mxu0 %v249
      %334 = vmatpush1.msra.mxu0 %v248
      %335 = vmatprep.subr.mxu0 %v253
      %336 = vmatpush1.msra.mxu0 %v252
      %337 = vmatprep.subr.mxu0 %v257
      %338 = vmatpush1.msra.mxu0 %v256
      %339 = vmatprep.subr.mxu0 0.0
      %340 = vmatpush1.msra.mxu0 0.0
      %341 = vmatprep.subr.mxu0 0.0
      %342 = vmatpush1.msra.mxu0 0.0
      %343 = vmatprep.subr.mxu0 0.0
      %344 = vmatpush1.msra.mxu0 0.0
      %345 = vmatprep.subr.mxu0 0.0
      %346 = vmatpush1.msra.mxu0 0.0
      %347 = vmatprep.subr.mxu0 0.0
      %348 = vmatpush1.msra.mxu0 0.0
      %349 = vmatprep.subr.mxu0 0.0
      %350 = vmatpush1.msra.mxu0 0.0
      %351 = vmatprep.subr.mxu0 0.0
      %352 = vmatpush1.msra.mxu0 0.0
      %353 = vmatprep.subr.mxu0 0.0
      %354 = vmatpush1.msra.mxu0 0.0
      %355 = vmatprep.subr.mxu0 0.0
      %356 = vmatpush1.msra.mxu0 0.0
      %357 = vmatprep.subr.mxu0 0.0
      %358 = vmatpush1.msra.mxu0 0.0
      %359 = vmatprep.subr.mxu0 0.0
      %360 = vmatpush1.msra.mxu0 0.0
      %361 = vmatprep.subr.mxu0 0.0
      %362 = vmatpush1.msra.mxu0 0.0
      %363 = vmatprep.subr.mxu0 0.0
      %364 = vmatpush1.msra.mxu0 0.0
      %365 = vmatprep.subr.mxu0 0.0
      %366 = vmatpush1.msra.mxu0 0.0
      %367 = vmatprep.subr.mxu0 0.0
      %368 = vmatpush1.msra.mxu0 0.0
      %369 = vmatprep.subr.mxu0 0.0
      %370 = vmatpush1.msra.mxu0 0.0
      %371 = vmatprep.subr.mxu0 0.0
      %372 = vmatpush1.msra.mxu0 0.0
      %373 = vmatprep.subr.mxu0 0.0
      %374 = vmatpush1.msra.mxu0 0.0
      %375 = vmatprep.subr.mxu0 0.0
      %376 = vmatpush1.msra.mxu0 0.0
      %377 = vmatprep.subr.mxu0 0.0
      %378 = vmatpush1.msra.mxu0 0.0
      %379 = vmatprep.subr.mxu0 0.0
      %380 = vmatpush1.msra.mxu0 0.0
      %381 = vmatprep.subr.mxu0 0.0
      %382 = vmatpush1.msra.mxu0 0.0
      %383 = vmatprep.subr.mxu0 0.0
      %384 = vmatpush1.msra.mxu0 0.0
      %385 = vmatprep.subr.mxu0 0.0
      %386 = vmatpush1.msra.mxu0 0.0
      %387 = vmatprep.subr.mxu0 0.0
      %388 = vmatpush1.msra.mxu0 0.0
      %389 = vmatprep.subr.mxu0 0.0
      %390 = vmatpush1.msra.mxu0 0.0
      %391 = vmatprep.subr.mxu0 0.0
      %392 = vmatpush1.msra.mxu0 0.0
      %393 = vmatprep.subr.mxu0 0.0
      %394 = vmatpush1.msra.mxu0 0.0
      %395 = vmatprep.mubr.f32.mxu0 0.0
      %396 = vmatmul.mubr.f32.gmra.mrb[0].mxu0 %v284
      %v397 = vpop.f32.mrb[0].mxu0
      %v398 = vadd.f32 %v265, %v397
      %v399 = vpop.f32.mrb[0].mxu0
      %v400 = vadd.f32 %v269, %v399
      %401 = vmatprep.mubr.f32.mxu0 0.0
      %402 = vmatmul.mubr.f32.gmra.mrb[0].mxu0 %v287
      %v403 = vpop.f32.mrb[0].mxu0
      %v404 = vadd.f32 %v265, %v403
      %v405 = vpop.f32.mrb[0].mxu0
      %v406 = vadd.f32 %v269, %v405
      %407 = vmatprep.mubr.f32.mxu0 0.0
      %408 = vmatmul.mubr.f32.gmra.mrb[0].mxu0 %v290
      %v409 = vpop.f32.mrb[0].mxu0
      %v410 = vadd.f32 %v265, %v409
      %v411 = vpop.f32.mrb[0].mxu0
      %v412 = vadd.f32 %v269, %v411
      %413 = vmatprep.mubr.f32.mxu0 0.0
      %414 = vmatmul.mubr.f32.gmra.mrb[0].mxu0 %v293
      %v415 = vpop.f32.mrb[0].mxu0
      %v416 = vadd.f32 %v265, %v415
      %v417 = vpop.f32.mrb[0].mxu0
      %v418 = vadd.f32 %v269, %v417
      %419 = vmatprep.mubr.f32.mxu0 0.0
      %420 = vmatmul.mubr.f32.gmra.mrb[0].mxu0 %v296
      %v421 = vpop.f32.mrb[0].mxu0
      %v422 = vadd.f32 %v265, %v421
      %v423 = vpop.f32.mrb[0].mxu0
      %v424 = vadd.f32 %v269, %v423
      %425 = vmatprep.mubr.f32.mxu0 0.0
      %426 = vmatmul.mubr.f32.gmra.mrb[0].mxu0 %v299
      %v427 = vpop.f32.mrb[0].mxu0
      %v428 = vadd.f32 %v265, %v427
      %v429 = vpop.f32.mrb[0].mxu0
      %v430 = vadd.f32 %v269, %v429
      %431 = vmatprep.mubr.f32.mxu0 0.0
      %432 = vmatmul.mubr.f32.gmra.mrb[0].mxu0 %v302
      %v433 = vpop.f32.mrb[0].mxu0
      %v434 = vadd.f32 %v265, %v433
      %v435 = vpop.f32.mrb[0].mxu0
      %v436 = vadd.f32 %v269, %v435
      %437 = vmatprep.mubr.f32.mxu0 0.0
      %438 = vmatmul.mubr.f32.gmra.mrb[0].mxu0 %v305
      %v439 = vpop.f32.mrb[0].mxu0
      %v440 = vadd.f32 %v265, %v439
      %v441 = vpop.f32.mrb[0].mxu0
      %v442 = vadd.f32 %v269, %v441
      %443 = vmatprep.mubr.f32.mxu0 0.0
      %444 = vmatmul.mubr.f32.gmra.mrb[0].mxu0 %v308
      %v445 = vpop.f32.mrb[0].mxu0
      %v446 = vadd.f32 %v265, %v445
      %v447 = vpop.f32.mrb[0].mxu0
      %v448 = vadd.f32 %v269, %v447
      %449 = vmatprep.mubr.f32.mxu0 0.0
      %450 = vmatmul.mubr.f32.gmra.mrb[0].mxu0 %v311
      %v451 = vpop.f32.mrb[0].mxu0
      %v452 = vadd.f32 %v265, %v451
      %v453 = vpop.f32.mrb[0].mxu0
      %v454 = vadd.f32 %v269, %v453
      %455 = vmatprep.mubr.f32.mxu0 0.0
      %456 = vmatmul.mubr.f32.gmra.mrb[0].mxu0 %v314
      %v457 = vpop.f32.mrb[0].mxu0
      %v458 = vadd.f32 %v265, %v457
      %v459 = vpop.f32.mrb[0].mxu0
      %v460 = vadd.f32 %v269, %v459
      %461 = vmatprep.mubr.f32.mxu0 0.0
      %462 = vmatmul.mubr.f32.gmra.mrb[0].mxu0 %v317
      %v463 = vpop.f32.mrb[0].mxu0
      %v464 = vadd.f32 %v265, %v463
      %v465 = vpop.f32.mrb[0].mxu0
      %v466 = vadd.f32 %v269, %v465
      %467 = vmatprep.mubr.f32.mxu0 0.0
      %468 = vmatmul.mubr.f32.gmra.mrb[0].mxu0 %v320
      %v469 = vpop.f32.mrb[0].mxu0
      %v470 = vadd.f32 %v265, %v469
      %v471 = vpop.f32.mrb[0].mxu0
      %v472 = vadd.f32 %v269, %v471
      %473 = vmatprep.mubr.f32.mxu0 0.0
      %474 = vmatmul.mubr.f32.gmra.mrb[0].mxu0 %v323
      %v475 = vpop.f32.mrb[0].mxu0
      %v476 = vadd.f32 %v265, %v475
      %v477 = vpop.f32.mrb[0].mxu0
      %v478 = vadd.f32 %v269, %v477
      %479 = vmatprep.mubr.f32.mxu0 0.0
      %480 = vmatmul.mubr.f32.gmra.mrb[0].mxu0 %v326
      %v481 = vpop.f32.mrb[0].mxu0
      %v482 = vadd.f32 %v265, %v481
      %v483 = vpop.f32.mrb[0].mxu0
      %v484 = vadd.f32 %v269, %v483
      %485 = vmatprep.mubr.f32.mxu0 0.0
      %486 = vmatmul.mubr.f32.gmra.mrb[0].mxu0 %v329
      %v487 = vpop.f32.mrb[0].mxu0
      %v488 = vadd.f32 %v265, %v487
      %v489 = vpop.f32.mrb[0].mxu0
      %v490 = vadd.f32 %v269, %v489
      %491 = vdwg.mxu0
      %492 = vmatprep.subr.mxu0 %v247
      %493 = vmatpush1.msra.mxu0 %v246
      %494 = vmatprep.subr.mxu0 %v251
      %495 = vmatpush1.msra.mxu0 %v250
      %496 = vmatprep.subr.mxu0 %v255
      %497 = vmatpush1.msra.mxu0 %v254
      %498 = vmatprep.subr.mxu0 %v259
      %499 = vmatpush1.msra.mxu0 %v258
      %500 = vmatprep.subr.mxu0 0.0
      %501 = vmatpush1.msra.mxu0 0.0
      %502 = vmatprep.subr.mxu0 0.0
      %503 = vmatpush1.msra.mxu0 0.0
      %504 = vmatprep.subr.mxu0 0.0
      %505 = vmatpush1.msra.mxu0 0.0
      %506 = vmatprep.subr.mxu0 0.0
      %507 = vmatpush1.msra.mxu0 0.0
      %508 = vmatprep.subr.mxu0 0.0
      %509 = vmatpush1.msra.mxu0 0.0
      %510 = vmatprep.subr.mxu0 0.0
      %511 = vmatpush1.msra.mxu0 0.0
      %512 = vmatprep.subr.mxu0 0.0
      %513 = vmatpush1.msra.mxu0 0.0
      %514 = vmatprep.subr.mxu0 0.0
      %515 = vmatpush1.msra.mxu0 0.0
      %516 = vmatprep.subr.mxu0 0.0
      %517 = vmatpush1.msra.mxu0 0.0
      %518 = vmatprep.subr.mxu0 0.0
      %519 = vmatpush1.msra.mxu0 0.0
      %520 = vmatprep.subr.mxu0 0.0
      %521 = vmatpush1.msra.mxu0 0.0
      %522 = vmatprep.subr.mxu0 0.0
      %523 = vmatpush1.msra.mxu0 0.0
      %524 = vmatprep.subr.mxu0 0.0
      %525 = vmatpush1.msra.mxu0 0.0
      %526 = vmatprep.subr.mxu0 0.0
      %527 = vmatpush1.msra.mxu0 0.0
      %528 = vmatprep.subr.mxu0 0.0
      %529 = vmatpush1.msra.mxu0 0.0
      %530 = vmatprep.subr.mxu0 0.0
      %531 = vmatpush1.msra.mxu0 0.0
      %532 = vmatprep.subr.mxu0 0.0
      %533 = vmatpush1.msra.mxu0 0.0
      %534 = vmatprep.subr.mxu0 0.0
      %535 = vmatpush1.msra.mxu0 0.0
      %536 = vmatprep.subr.mxu0 0.0
      %537 = vmatpush1.msra.mxu0 0.0
      %538 = vmatprep.subr.mxu0 0.0
      %539 = vmatpush1.msra.mxu0 0.0
      %540 = vmatprep.subr.mxu0 0.0
      %541 = vmatpush1.msra.mxu0 0.0
      %542 = vmatprep.subr.mxu0 0.0
      %543 = vmatpush1.msra.mxu0 0.0
      %544 = vmatprep.subr.mxu0 0.0
      %545 = vmatpush1.msra.mxu0 0.0
      %546 = vmatprep.subr.mxu0 0.0
      %547 = vmatpush1.msra.mxu0 0.0
      %548 = vmatprep.subr.mxu0 0.0
      %549 = vmatpush1.msra.mxu0 0.0
      %550 = vmatprep.subr.mxu0 0.0
      %551 = vmatpush1.msra.mxu0 0.0
      %552 = vmatprep.subr.mxu0 0.0
      %553 = vmatpush1.msra.mxu0 0.0
      %554 = vmatprep.subr.mxu0 0.0
      %555 = vmatpush1.msra.mxu0 0.0
      %556 = vmatprep.mubr.f32.mxu0 0.0
      %557 = vmatmul.mubr.f32.gmra.mrb[0].mxu0 %v284
      %v558 = vpop.f32.mrb[0].mxu0
      %v559 = vadd.f32 %v273, %v558
      %v560 = vpop.f32.mrb[0].mxu0
      %v561 = vadd.f32 %v277, %v560
      %562 = vmatprep.mubr.f32.mxu0 0.0
      %563 = vmatmul.mubr.f32.gmra.mrb[0].mxu0 %v287
      %v564 = vpop.f32.mrb[0].mxu0
      %v565 = vadd.f32 %v273, %v564
      %v566 = vpop.f32.mrb[0].mxu0
      %v567 = vadd.f32 %v277, %v566
      %568 = vmatprep.mubr.f32.mxu0 0.0
      %569 = vmatmul.mubr.f32.gmra.mrb[0].mxu0 %v290
      %v570 = vpop.f32.mrb[0].mxu0
      %v571 = vadd.f32 %v273, %v570
      %v572 = vpop.f32.mrb[0].mxu0
      %v573 = vadd.f32 %v277, %v572
      %574 = vmatprep.mubr.f32.mxu0 0.0
      %575 = vmatmul.mubr.f32.gmra.mrb[0].mxu0 %v293
      %v576 = vpop.f32.mrb[0].mxu0
      %v577 = vadd.f32 %v273, %v576
      %v578 = vpop.f32.mrb[0].mxu0
      %v579 = vadd.f32 %v277, %v578
      %580 = vmatprep.mubr.f32.mxu0 0.0
      %581 = vmatmul.mubr.f32.gmra.mrb[0].mxu0 %v296
      %v582 = vpop.f32.mrb[0].mxu0
      %v583 = vadd.f32 %v273, %v582
      %v584 = vpop.f32.mrb[0].mxu0
      %v585 = vadd.f32 %v277, %v584
      %586 = vmatprep.mubr.f32.mxu0 0.0
      %587 = vmatmul.mubr.f32.gmra.mrb[0].mxu0 %v299
      %v588 = vpop.f32.mrb[0].mxu0
      %v589 = vadd.f32 %v273, %v588
      %v590 = vpop.f32.mrb[0].mxu0
      %v591 = vadd.f32 %v277, %v590
      %592 = vmatprep.mubr.f32.mxu0 0.0
      %593 = vmatmul.mubr.f32.gmra.mrb[0].mxu0 %v302
      %v594 = vpop.f32.mrb[0].mxu0
      %v595 = vadd.f32 %v273, %v594
      %v596 = vpop.f32.mrb[0].mxu0
      %v597 = vadd.f32 %v277, %v596
      %598 = vmatprep.mubr.f32.mxu0 0.0
      %599 = vmatmul.mubr.f32.gmra.mrb[0].mxu0 %v305
      %v600 = vpop.f32.mrb[0].mxu0
      %v601 = vadd.f32 %v273, %v600
      %v602 = vpop.f32.mrb[0].mxu0
      %v603 = vadd.f32 %v277, %v602
      %604 = vmatprep.mubr.f32.mxu0 0.0
      %605 = vmatmul.mubr.f32.gmra.mrb[0].mxu0 %v308
      %v606 = vpop.f32.mrb[0].mxu0
      %v607 = vadd.f32 %v273, %v606
      %v608 = vpop.f32.mrb[0].mxu0
      %v609 = vadd.f32 %v277, %v608
      %610 = vmatprep.mubr.f32.mxu0 0.0
      %611 = vmatmul.mubr.f32.gmra.mrb[0].mxu0 %v311
      %v612 = vpop.f32.mrb[0].mxu0
      %v613 = vadd.f32 %v273, %v612
      %v614 = vpop.f32.mrb[0].mxu0
      %v615 = vadd.f32 %v277, %v614
      %616 = vmatprep.mubr.f32.mxu0 0.0
      %617 = vmatmul.mubr.f32.gmra.mrb[0].mxu0 %v314
      %v618 = vpop.f32.mrb[0].mxu0
      %v619 = vadd.f32 %v273, %v618
      %v620 = vpop.f32.mrb[0].mxu0
      %v621 = vadd.f32 %v277, %v620
      %622 = vmatprep.mubr.f32.mxu0 0.0
      %623 = vmatmul.mubr.f32.gmra.mrb[0].mxu0 %v317
      %v624 = vpop.f32.mrb[0].mxu0
      %v625 = vadd.f32 %v273, %v624
      %v626 = vpop.f32.mrb[0].mxu0
      %v627 = vadd.f32 %v277, %v626
      %628 = vmatprep.mubr.f32.mxu0 0.0
      %629 = vmatmul.mubr.f32.gmra.mrb[0].mxu0 %v320
      %v630 = vpop.f32.mrb[0].mxu0
      %v631 = vadd.f32 %v273, %v630
      %v632 = vpop.f32.mrb[0].mxu0
      %v633 = vadd.f32 %v277, %v632
      %634 = vmatprep.mubr.f32.mxu0 0.0
      %635 = vmatmul.mubr.f32.gmra.mrb[0].mxu0 %v323
      %v636 = vpop.f32.mrb[0].mxu0
      %v637 = vadd.f32 %v273, %v636
      %v638 = vpop.f32.mrb[0].mxu0
      %v639 = vadd.f32 %v277, %v638
      %640 = vmatprep.mubr.f32.mxu0 0.0
      %641 = vmatmul.mubr.f32.gmra.mrb[0].mxu0 %v326
      %v642 = vpop.f32.mrb[0].mxu0
      %v643 = vadd.f32 %v273, %v642
      %v644 = vpop.f32.mrb[0].mxu0
      %v645 = vadd.f32 %v277, %v644
      %646 = vmatprep.mubr.f32.mxu0 0.0
      %647 = vmatmul.mubr.f32.gmra.mrb[0].mxu0 %v329
      %v648 = vpop.f32.mrb[0].mxu0
      %v649 = vadd.f32 %v273, %v648
      %v650 = vpop.f32.mrb[0].mxu0
      %v651 = vadd.f32 %v277, %v650
      %652 = vdwg.mxu0
      %v653 = vmax.f32 %v398, 0.0
      %v654 = vmax.f32 %v400, 0.0
      %v655 = vmax.f32 %v559, 0.0
      %v656 = vmax.f32 %v561, 0.0
      %v657 = vmax.f32 %v404, 0.0
      %v658 = vmax.f32 %v406, 0.0
      %v659 = vmax.f32 %v565, 0.0
      %v660 = vmax.f32 %v567, 0.0
      %v661 = vmax.f32 %v410, 0.0
      %v662 = vmax.f32 %v412, 0.0
      %v663 = vmax.f32 %v571, 0.0
      %v664 = vmax.f32 %v573, 0.0
      %v665 = vmax.f32 %v416, 0.0
      %v666 = vmax.f32 %v418, 0.0
      %v667 = vmax.f32 %v577, 0.0
      %v668 = vmax.f32 %v579, 0.0
      %v669 = vmax.f32 %v422, 0.0
      %v670 = vmax.f32 %v424, 0.0
      %v671 = vmax.f32 %v583, 0.0
      %v672 = vmax.f32 %v585, 0.0
      %v673 = vmax.f32 %v428, 0.0
      %v674 = vmax.f32 %v430, 0.0
      %v675 = vmax.f32 %v589, 0.0
      %v676 = vmax.f32 %v591, 0.0
      %v677 = vmax.f32 %v434, 0.0
      %v678 = vmax.f32 %v436, 0.0
      %v679 = vmax.f32 %v595, 0.0
      %v680 = vmax.f32 %v597, 0.0
      %v681 = vmax.f32 %v440, 0.0
      %v682 = vmax.f32 %v442, 0.0
      %v683 = vmax.f32 %v601, 0.0
      %v684 = vmax.f32 %v603, 0.0
      %v685 = vmax.f32 %v446, 0.0
      %v686 = vmax.f32 %v448, 0.0
      %v687 = vmax.f32 %v607, 0.0
      %v688 = vmax.f32 %v609, 0.0
      %v689 = vmax.f32 %v452, 0.0
      %v690 = vmax.f32 %v454, 0.0
      %v691 = vmax.f32 %v613, 0.0
      %v692 = vmax.f32 %v615, 0.0
      %v693 = vmax.f32 %v458, 0.0
      %v694 = vmax.f32 %v460, 0.0
      %v695 = vmax.f32 %v619, 0.0
      %v696 = vmax.f32 %v621, 0.0
      %v697 = vmax.f32 %v464, 0.0
      %v698 = vmax.f32 %v466, 0.0
      %v699 = vmax.f32 %v625, 0.0
      %v700 = vmax.f32 %v627, 0.0
      %v701 = vmax.f32 %v470, 0.0
      %v702 = vmax.f32 %v472, 0.0
      %v703 = vmax.f32 %v631, 0.0
      %v704 = vmax.f32 %v633, 0.0
      %v705 = vmax.f32 %v476, 0.0
      %v706 = vmax.f32 %v478, 0.0
      %v707 = vmax.f32 %v637, 0.0
      %v708 = vmax.f32 %v639, 0.0
      %v709 = vmax.f32 %v482, 0.0
      %v710 = vmax.f32 %v484, 0.0
      %v711 = vmax.f32 %v643, 0.0
      %v712 = vmax.f32 %v645, 0.0
      %v713 = vmax.f32 %v488, 0.0
      %v714 = vmax.f32 %v490, 0.0
      %v715 = vmax.f32 %v649, 0.0
      %v716 = vmax.f32 %v651, 0.0
      %v717 = vld [vmem:[%s3] sm:$0xff]
      %v718 = vld [vmem:[%s3 + $0x8] sm:$0xff]
      %v719 = vld [vmem:[%s3 + $0x10] sm:$0xff]
      %v720 = vld [vmem:[%s3 + $0x18] sm:$0xff]
      %v721 = vld [vmem:[%s3 + $0x20] sm:$0xff]
      %v722 = vld [vmem:[%s3 + $0x28] sm:$0xff]
      %v723 = vld [vmem:[%s3 + $0x30] sm:$0xff]
      %v724 = vld [vmem:[%s3 + $0x38] sm:$0xff]
      %v725 = vld [vmem:[%s3 + $0x40] sm:$0xff]
      %v726 = vld [vmem:[%s3 + $0x48] sm:$0xff]
      %v727 = vld [vmem:[%s3 + $0x50] sm:$0xff]
      %v728 = vld [vmem:[%s3 + $0x58] sm:$0xff]
      %v729 = vld [vmem:[%s3 + $0x60] sm:$0xff]
      %v730 = vld [vmem:[%s3 + $0x68] sm:$0xff]
      %v731 = vld [vmem:[%s3 + $0x70] sm:$0xff]
      %v732 = vld [vmem:[%s3 + $0x78] sm:$0xff]
      %v733 = vld [vmem:[%s3 + $0x80] sm:$0xff]
      %v734 = vld [vmem:[%s3 + $0x88] sm:$0xff]
      %v735 = vld [vmem:[%s3 + $0x90] sm:$0xff]
      %v736 = vld [vmem:[%s3 + $0x98] sm:$0xff]
      %v737 = vld [vmem:[%s3 + $0xa0] sm:$0xff]
      %v738 = vld [vmem:[%s3 + $0xa8] sm:$0xff]
      %v739 = vld [vmem:[%s3 + $0xb0] sm:$0xff]
      %v740 = vld [vmem:[%s3 + $0xb8] sm:$0xff]
      %v741 = vld [vmem:[%s3 + $0xc0] sm:$0xff]
      %v742 = vld [vmem:[%s3 + $0xc8] sm:$0xff]
      %v743 = vld [vmem:[%s3 + $0xd0] sm:$0xff]
      %v744 = vld [vmem:[%s3 + $0xd8] sm:$0xff]
      %v745 = vld [vmem:[%s3 + $0xe0] sm:$0xff]
      %v746 = vld [vmem:[%s3 + $0xe8] sm:$0xff]
      %v747 = vld [vmem:[%s3 + $0xf0] sm:$0xff]
      %v748 = vld [vmem:[%s3 + $0xf8] sm:$0xff]
      %v749 = vld [vmem:[%s3 + $0x100] sm:$0xff]
      %v750 = vld [vmem:[%s3 + $0x108] sm:$0xff]
      %v751 = vld [vmem:[%s3 + $0x110] sm:$0xff]
      %v752 = vld [vmem:[%s3 + $0x118] sm:$0xff]
      %v753 = vld [vmem:[%s3 + $0x120] sm:$0xff]
      %v754 = vld [vmem:[%s3 + $0x128] sm:$0xff]
      %v755 = vld [vmem:[%s3 + $0x130] sm:$0xff]
      %v756 = vld [vmem:[%s3 + $0x138] sm:$0xff]
      %v757 = vld [vmem:[%s3 + $0x140] sm:$0xff]
      %v758 = vld [vmem:[%s3 + $0x148] sm:$0xff]
      %v759 = vld [vmem:[%s3 + $0x150] sm:$0xff]
      %v760 = vld [vmem:[%s3 + $0x158] sm:$0xff]
      %v761 = vld [vmem:[%s3 + $0x160] sm:$0xff]
      %v762 = vld [vmem:[%s3 + $0x168] sm:$0xff]
      %v763 = vld [vmem:[%s3 + $0x170] sm:$0xff]
      %v764 = vld [vmem:[%s3 + $0x178] sm:$0xff]
      %v765 = vld [vmem:[%s3 + $0x180] sm:$0xff]
      %v766 = vld [vmem:[%s3 + $0x188] sm:$0xff]
      %v767 = vld [vmem:[%s3 + $0x190] sm:$0xff]
      %v768 = vld [vmem:[%s3 + $0x198] sm:$0xff]
      %v769 = vld [vmem:[%s3 + $0x1a0] sm:$0xff]
      %v770 = vld [vmem:[%s3 + $0x1a8] sm:$0xff]
      %v771 = vld [vmem:[%s3 + $0x1b0] sm:$0xff]
      %v772 = vld [vmem:[%s3 + $0x1b8] sm:$0xff]
      %v773 = vld [vmem:[%s3 + $0x1c0] sm:$0xff]
      %v774 = vld [vmem:[%s3 + $0x1c8] sm:$0xff]
      %v775 = vld [vmem:[%s3 + $0x1d0] sm:$0xff]
      %v776 = vld [vmem:[%s3 + $0x1d8] sm:$0xff]
      %v777 = vld [vmem:[%s3 + $0x1e0] sm:$0xff]
      %v778 = vld [vmem:[%s3 + $0x1e8] sm:$0xff]
      %v779 = vld [vmem:[%s3 + $0x1f0] sm:$0xff]
      %v780 = vld [vmem:[%s3 + $0x1f8] sm:$0xff]
      %v781 = vld [vmem:[%s4] sm:$0x1]
      %v783 = vlaneseq
      %v784 = vshrl.u32 %v783, 7
      %v785 = vsub.s32 0, %v784
      %v786 = vrot.slane %v781, %v785
      %788 = vmatprep.subr.mxu0 0.0
      %789 = vmatpush1.msra.mxu0 %v717
      %790 = vmatprep.subr.mxu0 0.0
      %791 = vmatpush1.msra.mxu0 %v718
      %792 = vmatprep.subr.mxu0 0.0
      %793 = vmatpush1.msra.mxu0 %v719
      %794 = vmatprep.subr.mxu0 0.0
      %795 = vmatpush1.msra.mxu0 %v720
      %796 = vmatprep.subr.mxu0 0.0
      %797 = vmatpush1.msra.mxu0 %v721
      %798 = vmatprep.subr.mxu0 0.0
      %799 = vmatpush1.msra.mxu0 %v722
      %800 = vmatprep.subr.mxu0 0.0
      %801 = vmatpush1.msra.mxu0 %v723
      %802 = vmatprep.subr.mxu0 0.0
      %803 = vmatpush1.msra.mxu0 %v724
      %804 = vmatprep.subr.mxu0 0.0
      %805 = vmatpush1.msra.mxu0 %v725
      %806 = vmatprep.subr.mxu0 0.0
      %807 = vmatpush1.msra.mxu0 %v726
      %808 = vmatprep.subr.mxu0 0.0
      %809 = vmatpush1.msra.mxu0 %v727
      %810 = vmatprep.subr.mxu0 0.0
      %811 = vmatpush1.msra.mxu0 %v728
      %812 = vmatprep.subr.mxu0 0.0
      %813 = vmatpush1.msra.mxu0 %v729
      %814 = vmatprep.subr.mxu0 0.0
      %815 = vmatpush1.msra.mxu0 %v730
      %816 = vmatprep.subr.mxu0 0.0
      %817 = vmatpush1.msra.mxu0 %v731
      %818 = vmatprep.subr.mxu0 0.0
      %819 = vmatpush1.msra.mxu0 %v732
      %820 = vmatprep.subr.mxu0 0.0
      %821 = vmatpush1.msra.mxu0 %v733
      %822 = vmatprep.subr.mxu0 0.0
      %823 = vmatpush1.msra.mxu0 %v734
      %824 = vmatprep.subr.mxu0 0.0
      %825 = vmatpush1.msra.mxu0 %v735
      %826 = vmatprep.subr.mxu0 0.0
      %827 = vmatpush1.msra.mxu0 %v736
      %828 = vmatprep.subr.mxu0 0.0
      %829 = vmatpush1.msra.mxu0 %v737
      %830 = vmatprep.subr.mxu0 0.0
      %831 = vmatpush1.msra.mxu0 %v738
      %832 = vmatprep.subr.mxu0 0.0
      %833 = vmatpush1.msra.mxu0 %v739
      %834 = vmatprep.subr.mxu0 0.0
      %835 = vmatpush1.msra.mxu0 %v740
      %836 = vmatprep.subr.mxu0 0.0
      %837 = vmatpush1.msra.mxu0 %v741
      %838 = vmatprep.subr.mxu0 0.0
      %839 = vmatpush1.msra.mxu0 %v742
      %840 = vmatprep.subr.mxu0 0.0
      %841 = vmatpush1.msra.mxu0 %v743
      %842 = vmatprep.subr.mxu0 0.0
      %843 = vmatpush1.msra.mxu0 %v744
      %844 = vmatprep.subr.mxu0 0.0
      %845 = vmatpush1.msra.mxu0 %v745
      %846 = vmatprep.subr.mxu0 0.0
      %847 = vmatpush1.msra.mxu0 %v746
      %848 = vmatprep.subr.mxu0 0.0
      %849 = vmatpush1.msra.mxu0 %v747
      %850 = vmatprep.subr.mxu0 0.0
      %851 = vmatpush1.msra.mxu0 %v748
      %852 = vmatprep.mubr.f32.mxu0 %v654
      %853 = vmatmul.mubr.f32.gmra.mrb[0].mxu0 %v653
      %v854 = vpop.f32.mrb[0].mxu0
      %v855 = vadd.f32 %v786, %v854
      %v856 = vpop.f32.mrb[0].mxu0
      %857 = vmatprep.mubr.f32.mxu0 %v658
      %858 = vmatmul.mubr.f32.gmra.mrb[0].mxu0 %v657
      %v859 = vpop.f32.mrb[0].mxu0
      %v860 = vadd.f32 %v786, %v859
      %v861 = vpop.f32.mrb[0].mxu0
      %862 = vmatprep.mubr.f32.mxu0 %v662
      %863 = vmatmul.mubr.f32.gmra.mrb[0].mxu0 %v661
      %v864 = vpop.f32.mrb[0].mxu0
      %v865 = vadd.f32 %v786, %v864
      %v866 = vpop.f32.mrb[0].mxu0
      %867 = vmatprep.mubr.f32.mxu0 %v666
      %868 = vmatmul.mubr.f32.gmra.mrb[0].mxu0 %v665
      %v869 = vpop.f32.mrb[0].mxu0
      %v870 = vadd.f32 %v786, %v869
      %v871 = vpop.f32.mrb[0].mxu0
      %872 = vmatprep.mubr.f32.mxu0 %v670
      %873 = vmatmul.mubr.f32.gmra.mrb[0].mxu0 %v669
      %v874 = vpop.f32.mrb[0].mxu0
      %v875 = vadd.f32 %v786, %v874
      %v876 = vpop.f32.mrb[0].mxu0
      %877 = vmatprep.mubr.f32.mxu0 %v674
      %878 = vmatmul.mubr.f32.gmra.mrb[0].mxu0 %v673
      %v879 = vpop.f32.mrb[0].mxu0
      %v880 = vadd.f32 %v786, %v879
      %v881 = vpop.f32.mrb[0].mxu0
      %882 = vmatprep.mubr.f32.mxu0 %v678
      %883 = vmatmul.mubr.f32.gmra.mrb[0].mxu0 %v677
      %v884 = vpop.f32.mrb[0].mxu0
      %v885 = vadd.f32 %v786, %v884
      %v886 = vpop.f32.mrb[0].mxu0
      %887 = vmatprep.mubr.f32.mxu0 %v682
      %888 = vmatmul.mubr.f32.gmra.mrb[0].mxu0 %v681
      %v889 = vpop.f32.mrb[0].mxu0
      %v890 = vadd.f32 %v786, %v889
      %v891 = vpop.f32.mrb[0].mxu0
      %892 = vmatprep.mubr.f32.mxu0 %v686
      %893 = vmatmul.mubr.f32.gmra.mrb[0].mxu0 %v685
      %v894 = vpop.f32.mrb[0].mxu0
      %v895 = vadd.f32 %v786, %v894
      %v896 = vpop.f32.mrb[0].mxu0
      %897 = vmatprep.mubr.f32.mxu0 %v690
      %898 = vmatmul.mubr.f32.gmra.mrb[0].mxu0 %v689
      %v899 = vpop.f32.mrb[0].mxu0
      %v900 = vadd.f32 %v786, %v899
      %v901 = vpop.f32.mrb[0].mxu0
      %902 = vmatprep.mubr.f32.mxu0 %v694
      %903 = vmatmul.mubr.f32.gmra.mrb[0].mxu0 %v693
      %v904 = vpop.f32.mrb[0].mxu0
      %v905 = vadd.f32 %v786, %v904
      %v906 = vpop.f32.mrb[0].mxu0
      %907 = vmatprep.mubr.f32.mxu0 %v698
      %908 = vmatmul.mubr.f32.gmra.mrb[0].mxu0 %v697
      %v909 = vpop.f32.mrb[0].mxu0
      %v910 = vadd.f32 %v786, %v909
      %v911 = vpop.f32.mrb[0].mxu0
      %912 = vmatprep.mubr.f32.mxu0 %v702
      %913 = vmatmul.mubr.f32.gmra.mrb[0].mxu0 %v701
      %v914 = vpop.f32.mrb[0].mxu0
      %v915 = vadd.f32 %v786, %v914
      %v916 = vpop.f32.mrb[0].mxu0
      %917 = vmatprep.mubr.f32.mxu0 %v706
      %918 = vmatmul.mubr.f32.gmra.mrb[0].mxu0 %v705
      %v919 = vpop.f32.mrb[0].mxu0
      %v920 = vadd.f32 %v786, %v919
      %v921 = vpop.f32.mrb[0].mxu0
      %922 = vmatprep.mubr.f32.mxu0 %v710
      %923 = vmatmul.mubr.f32.gmra.mrb[0].mxu0 %v709
      %v924 = vpop.f32.mrb[0].mxu0
      %v925 = vadd.f32 %v786, %v924
      %v926 = vpop.f32.mrb[0].mxu0
      %927 = vmatprep.mubr.f32.mxu0 %v714
      %928 = vmatmul.mubr.f32.gmra.mrb[0].mxu0 %v713
      %v929 = vpop.f32.mrb[0].mxu0
      %v930 = vadd.f32 %v786, %v929
      %v931 = vpop.f32.mrb[0].mxu0
      %932 = vdwg.mxu0
      %933 = vmatprep.subr.mxu0 0.0
      %934 = vmatpush1.msra.mxu0 %v749
      %935 = vmatprep.subr.mxu0 0.0
      %936 = vmatpush1.msra.mxu0 %v750
      %937 = vmatprep.subr.mxu0 0.0
      %938 = vmatpush1.msra.mxu0 %v751
      %939 = vmatprep.subr.mxu0 0.0
      %940 = vmatpush1.msra.mxu0 %v752
      %941 = vmatprep.subr.mxu0 0.0
      %942 = vmatpush1.msra.mxu0 %v753
      %943 = vmatprep.subr.mxu0 0.0
      %944 = vmatpush1.msra.mxu0 %v754
      %945 = vmatprep.subr.mxu0 0.0
      %946 = vmatpush1.msra.mxu0 %v755
      %947 = vmatprep.subr.mxu0 0.0
      %948 = vmatpush1.msra.mxu0 %v756
      %949 = vmatprep.subr.mxu0 0.0
      %950 = vmatpush1.msra.mxu0 %v757
      %951 = vmatprep.subr.mxu0 0.0
      %952 = vmatpush1.msra.mxu0 %v758
      %953 = vmatprep.subr.mxu0 0.0
      %954 = vmatpush1.msra.mxu0 %v759
      %955 = vmatprep.subr.mxu0 0.0
      %956 = vmatpush1.msra.mxu0 %v760
      %957 = vmatprep.subr.mxu0 0.0
      %958 = vmatpush1.msra.mxu0 %v761
      %959 = vmatprep.subr.mxu0 0.0
      %960 = vmatpush1.msra.mxu0 %v762
      %961 = vmatprep.subr.mxu0 0.0
      %962 = vmatpush1.msra.mxu0 %v763
      %963 = vmatprep.subr.mxu0 0.0
      %964 = vmatpush1.msra.mxu0 %v764
      %965 = vmatprep.subr.mxu0 0.0
      %966 = vmatpush1.msra.mxu0 %v765
      %967 = vmatprep.subr.mxu0 0.0
      %968 = vmatpush1.msra.mxu0 %v766
      %969 = vmatprep.subr.mxu0 0.0
      %970 = vmatpush1.msra.mxu0 %v767
      %971 = vmatprep.subr.mxu0 0.0
      %972 = vmatpush1.msra.mxu0 %v768
      %973 = vmatprep.subr.mxu0 0.0
      %974 = vmatpush1.msra.mxu0 %v769
      %975 = vmatprep.subr.mxu0 0.0
      %976 = vmatpush1.msra.mxu0 %v770
      %977 = vmatprep.subr.mxu0 0.0
      %978 = vmatpush1.msra.mxu0 %v771
      %979 = vmatprep.subr.mxu0 0.0
      %980 = vmatpush1.msra.mxu0 %v772
      %981 = vmatprep.subr.mxu0 0.0
      %982 = vmatpush1.msra.mxu0 %v773
      %983 = vmatprep.subr.mxu0 0.0
      %984 = vmatpush1.msra.mxu0 %v774
      %985 = vmatprep.subr.mxu0 0.0
      %986 = vmatpush1.msra.mxu0 %v775
      %987 = vmatprep.subr.mxu0 0.0
      %988 = vmatpush1.msra.mxu0 %v776
      %989 = vmatprep.subr.mxu0 0.0
      %990 = vmatpush1.msra.mxu0 %v777
      %991 = vmatprep.subr.mxu0 0.0
      %992 = vmatpush1.msra.mxu0 %v778
      %993 = vmatprep.subr.mxu0 0.0
      %994 = vmatpush1.msra.mxu0 %v779
      %995 = vmatprep.subr.mxu0 0.0
      %996 = vmatpush1.msra.mxu0 %v780
      %997 = vmatprep.mubr.f32.mxu0 %v656
      %998 = vmatmul.mubr.f32.gmra.mrb[0].mxu0 %v655
      %v999 = vpop.f32.mrb[0].mxu0
      %v1000 = vadd.f32 %v855, %v999
      %v1001 = vpop.f32.mrb[0].mxu0
      %1002 = vmatprep.mubr.f32.mxu0 %v660
      %1003 = vmatmul.mubr.f32.gmra.mrb[0].mxu0 %v659
      %v1004 = vpop.f32.mrb[0].mxu0
      %v1005 = vadd.f32 %v860, %v1004
      %v1006 = vpop.f32.mrb[0].mxu0
      %1007 = vmatprep.mubr.f32.mxu0 %v664
      %1008 = vmatmul.mubr.f32.gmra.mrb[0].mxu0 %v663
      %v1009 = vpop.f32.mrb[0].mxu0
      %v1010 = vadd.f32 %v865, %v1009
      %v1011 = vpop.f32.mrb[0].mxu0
      %1012 = vmatprep.mubr.f32.mxu0 %v668
      %1013 = vmatmul.mubr.f32.gmra.mrb[0].mxu0 %v667
      %v1014 = vpop.f32.mrb[0].mxu0
      %v1015 = vadd.f32 %v870, %v1014
      %v1016 = vpop.f32.mrb[0].mxu0
      %1017 = vmatprep.mubr.f32.mxu0 %v672
      %1018 = vmatmul.mubr.f32.gmra.mrb[0].mxu0 %v671
      %v1019 = vpop.f32.mrb[0].mxu0
      %v1020 = vadd.f32 %v875, %v1019
      %v1021 = vpop.f32.mrb[0].mxu0
      %1022 = vmatprep.mubr.f32.mxu0 %v676
      %1023 = vmatmul.mubr.f32.gmra.mrb[0].mxu0 %v675
      %v1024 = vpop.f32.mrb[0].mxu0
      %v1025 = vadd.f32 %v880, %v1024
      %v1026 = vpop.f32.mrb[0].mxu0
      %1027 = vmatprep.mubr.f32.mxu0 %v680
      %1028 = vmatmul.mubr.f32.gmra.mrb[0].mxu0 %v679
      %v1029 = vpop.f32.mrb[0].mxu0
      %v1030 = vadd.f32 %v885, %v1029
      %v1031 = vpop.f32.mrb[0].mxu0
      %1032 = vmatprep.mubr.f32.mxu0 %v684
      %1033 = vmatmul.mubr.f32.gmra.mrb[0].mxu0 %v683
      %v1034 = vpop.f32.mrb[0].mxu0
      %v1035 = vadd.f32 %v890, %v1034
      %v1036 = vpop.f32.mrb[0].mxu0
      %1037 = vmatprep.mubr.f32.mxu0 %v688
      %1038 = vmatmul.mubr.f32.gmra.mrb[0].mxu0 %v687
      %v1039 = vpop.f32.mrb[0].mxu0
      %v1040 = vadd.f32 %v895, %v1039
      %v1041 = vpop.f32.mrb[0].mxu0
      %1042 = vmatprep.mubr.f32.mxu0 %v692
      %1043 = vmatmul.mubr.f32.gmra.mrb[0].mxu0 %v691
      %v1044 = vpop.f32.mrb[0].mxu0
      %v1045 = vadd.f32 %v900, %v1044
      %v1046 = vpop.f32.mrb[0].mxu0
      %1047 = vmatprep.mubr.f32.mxu0 %v696
      %1048 = vmatmul.mubr.f32.gmra.mrb[0].mxu0 %v695
      %v1049 = vpop.f32.mrb[0].mxu0
      %v1050 = vadd.f32 %v905, %v1049
      %v1051 = vpop.f32.mrb[0].mxu0
      %1052 = vmatprep.mubr.f32.mxu0 %v700
      %1053 = vmatmul.mubr.f32.gmra.mrb[0].mxu0 %v699
      %v1054 = vpop.f32.mrb[0].mxu0
      %v1055 = vadd.f32 %v910, %v1054
      %v1056 = vpop.f32.mrb[0].mxu0
      %1057 = vmatprep.mubr.f32.mxu0 %v704
      %1058 = vmatmul.mubr.f32.gmra.mrb[0].mxu0 %v703
      %v1059 = vpop.f32.mrb[0].mxu0
      %v1060 = vadd.f32 %v915, %v1059
      %v1061 = vpop.f32.mrb[0].mxu0
      %1062 = vmatprep.mubr.f32.mxu0 %v708
      %1063 = vmatmul.mubr.f32.gmra.mrb[0].mxu0 %v707
      %v1064 = vpop.f32.mrb[0].mxu0
      %v1065 = vadd.f32 %v920, %v1064
      %v1066 = vpop.f32.mrb[0].mxu0
      %1067 = vmatprep.mubr.f32.mxu0 %v712
      %1068 = vmatmul.mubr.f32.gmra.mrb[0].mxu0 %v711
      %v1069 = vpop.f32.mrb[0].mxu0
      %v1070 = vadd.f32 %v925, %v1069
      %v1071 = vpop.f32.mrb[0].mxu0
      %1072 = vmatprep.mubr.f32.mxu0 %v716
      %1073 = vmatmul.mubr.f32.gmra.mrb[0].mxu0 %v715
      %v1074 = vpop.f32.mrb[0].mxu0
      %v1075 = vadd.f32 %v930, %v1074
      %v1076 = vpop.f32.mrb[0].mxu0
      %1077 = vdwg.mxu0
      %1078 = vst [vmem:[%s226] sm:$0xff] %v1000
      %1079 = vst [vmem:[%s226 + $0x8] sm:$0xff] %v1005
      %1080 = vst [vmem:[%s226 + $0x10] sm:$0xff] %v1010
      %1081 = vst [vmem:[%s226 + $0x18] sm:$0xff] %v1015
      %1082 = vst [vmem:[%s226 + $0x20] sm:$0xff] %v1020
      %1083 = vst [vmem:[%s226 + $0x28] sm:$0xff] %v1025
      %1084 = vst [vmem:[%s226 + $0x30] sm:$0xff] %v1030
      %1085 = vst [vmem:[%s226 + $0x38] sm:$0xff] %v1035
      %1086 = vst [vmem:[%s226 + $0x40] sm:$0xff] %v1040
      %1087 = vst [vmem:[%s226 + $0x48] sm:$0xff] %v1045
      %1088 = vst [vmem:[%s226 + $0x50] sm:$0xff] %v1050
      %1089 = vst [vmem:[%s226 + $0x58] sm:$0xff] %v1055
      %1090 = vst [vmem:[%s226 + $0x60] sm:$0xff] %v1060
      %1091 = vst [vmem:[%s226 + $0x68] sm:$0xff] %v1065
      %1092 = vst [vmem:[%s226 + $0x70] sm:$0xff] %v1070
      %1093 = vst [vmem:[%s226 + $0x78] sm:$0xff] %v1075
      %s1094 = smul.u32 16, %s16
      %p1095 = scmp.lt.s32.totalorder %s1094, 31
      %s1096 = scalar_select %p1095, %s1094, 31
      %s1097 = smul.addr %s1096, 8
      %s1098 = scalar_lea.vmem %s5, %s1097
      // Predicated region
      $region41: #{mlp_forward.1} parent=39 // pred_check
        %p1099 = pneg %p144
      $region42: #{mlp_forward.1} parent=39 // pred_check_branch
        %1101 = sbr.rel (%p1099) target = $region44
      $region43: #{mlp_forward.1} parent=39 // pred_region
        %s1102 = smul.u32 16, %s16
      $region44: #{mlp_forward.1} parent=39 // pred_fallthru
        _
    $region40: #{mlp_forward.1} parent=5 // pred_fallthru
      _
    %p1103 = scmp.le.s32.totalorder 2, %s11
    // Predicated region
    $region45: #{mlp_forward.1} parent=5 // pred_check
      %p1104 = pneg %p1103
    $region46: #{mlp_forward.1} parent=5 // pred_check_branch
      %1106 = sbr.rel (%p1104) target = $region48
    $region47: #{mlp_forward.1} parent=5 // pred_region
      %s1107 = ssub.s32 %s11, 2
      // Predicated region
      $region49: #{mlp_forward.1} parent=47 // pred_check
        %p1108 = pneg %p150
      $region50: #{mlp_forward.1} parent=47 // pred_check_branch
        %1110 = sbr.rel (%p1108) target = $region52
      $region51: #{mlp_forward.1} parent=47 // pred_region
        %s1111 = smul.u32 16, %s17
        %p1112 = scmp.lt.s32.totalorder %s1111, 31
        %s1113 = scalar_select %p1112, %s1111, 31
        %s1114 = smul.addr %s1113, 8
        %s1115 = scalar_lea.vmem %s5, %s1114
      $region52: #{mlp_forward.1} parent=47 // pred_fallthru
        _
    $region48: #{mlp_forward.1} parent=5 // pred_fallthru
      _
  $region6: #{mlp_forward.1} parent=0 // loop_footer
    %s15 = sadd.s32 1, %s11
  $region7: #{mlp_forward.1} parent=0 // loop_footer_branch
    %10 = sbr.rel target = $region3
  $region8: #{mlp_forward.1} parent=0 // loop_exit
    _

</llo_original>
